<compile_context>
chip_gen: v6e
topology: v6e:2x2x1
jax: 0.10.0
libtpu: 0.0.40
codegen_flags: <defaults>
</compile_context>

<pallas_src>
import jax
import jax.numpy as jnp
from jax.experimental import pallas as pl
from jax.experimental.pallas import tpu as pltpu

# ---------------- synthetic config (small shapes) ----------------
B = 8        # batch
S = 8        # seq_len
OH = 32      # cfg.oh_dim  (vocab length)
F = 16       # cfg.feature_dim
L1 = 64      # cfg.l1_units
L2 = 32      # cfg.l2_units
H = 32       # cfg.hidden_dim
SLOT = 16    # cfg.slot_num
INIT_MULT = 0.05   # cfg.init_mult
DET = 1e-10
BN_EPS = 1e-5


def _align8(x):
    return (x + 7) // 8 * 8


# ---------------- packed weight-slab layout ----------------
# Each block is [fan_in rows of W ; 1 row of b], lanes zero-padded to 64.
# Row offsets are 8-aligned so every slice starts on a sublane-tile boundary.
R_OH1 = 0                                  # Linear(OH, L1)
R_OH2 = _align8(R_OH1 + OH + 1)            # Linear(L1, L2)
R_CE1 = _align8(R_OH2 + L1 + 1)            # Linear(F,  L1)
R_CE2 = _align8(R_CE1 + F + 1)             # Linear(L1, L2)
R_HEAD = _align8(R_CE2 + L1 + 1)           # fused mean|log_var: [2*L2, 2*H]
R_ZS = _align8(R_HEAD + 2 * L2 + 1)        # Linear(H, SLOT)
R_DEC = _align8(R_ZS + H + 1)              # fused decoders: [SLOT, OH+F+F]
W_ROWS = _align8(R_DEC + SLOT + 1)         # = 344
W_COLS = 64
OUT_W = 128                                # lane-dense output slab width


# ---------------- in-kernel math helpers ----------------
def _softplus(x):
    # numerically stable softplus (exp/log/abs/max only)
    return jnp.maximum(x, 0.0) + jnp.log(1.0 + jnp.exp(-jnp.abs(x)))


def _softmax(x):
    m = jnp.max(x, axis=-1, keepdims=True)
    e = jnp.exp(x - m)
    inv = pl.reciprocal(jnp.sum(e, axis=-1, keepdims=True), approx=True)
    return e * inv


# ---------------- kernel ----------------
def dsi_kernel(data_ref, ce_ref, w_ref, out_ref):
    f32 = jnp.float32

    def lin(x, r0, fan_in, out_d):
        # [W ; b] block at rows [r0, r0+fan_in]; BN already folded in on host.
        w = w_ref[r0:r0 + fan_in, :out_d]
        b = w_ref[r0 + fan_in:r0 + fan_in + 1, :out_d]
        return jnp.dot(x, w, preferred_element_type=f32) + b

    data = data_ref[...]                         # [B, OH+H+S]
    oh = data[:, :OH]                            # [B, OH]
    eps = data[:, OH:OH + H]                     # [B, H]
    mask = data[:, OH + H:OH + H + S]            # [B, S]

    # ---- encoder over one-hot counts (dropout = identity in eval) ----
    h1 = _softplus(lin(oh, R_OH1, OH, L1))       # [B, L1]
    en_oh = _softplus(lin(h1, R_OH2, L1, L2))    # [B, L2]

    # ---- masked mean-pooling of ce, then encoder ----
    ce = ce_ref[...]                             # [B, S, F]
    msum = jnp.sum(mask, axis=1, keepdims=True)  # [B, 1]
    msum = jnp.where(msum == 0.0, 1.0, msum)     # torch.where(x==0, 1, x)
    pooled = jnp.sum(ce * mask[:, :, None], axis=1) / msum   # [B, F]
    h2 = _softplus(lin(pooled, R_CE1, F, L1))    # [B, L1]
    en_ce = _softplus(lin(h2, R_CE2, L1, L2))    # [B, L2]

    # ---- fused mean / log_var heads: one dot on en = concat(en_oh, en_ce) ----
    en = jnp.concatenate([en_oh, en_ce], axis=-1)        # [B, 2*L2]
    head = lin(en, R_HEAD, 2 * L2, 2 * H)                # [B, 2*H]
    z_mean = head[:, :H]
    z_log_var = head[:, H:]

    # ---- reparameterization: z = mean + exp(log_var/2) * eps ----
    z = z_mean + jnp.exp(z_log_var * 0.5) * eps          # [B, H]

    # ---- slot = softmax(z_slot(z)) ----
    slot = _softmax(lin(z, R_ZS, H, SLOT))               # [B, SLOT]

    # ---- fused decoders: one dot, then slice lanes ----
    dec = lin(slot, R_DEC, SLOT, OH + 2 * F)             # [B, OH+2F]
    recon_oh = _softmax(dec[:, :OH])                     # [B, OH]
    recon_ce_mean = dec[:, OH:OH + F]                    # [B, F]
    recon_ce_log_var = dec[:, OH + F:OH + 2 * F]         # [B, F]

    slot_log = jnp.log(slot + DET)                       # [B, SLOT]

    # ---- single lane-dense output slab [B, 128] ----
    pad = jnp.zeros((slot_log.shape[0], OUT_W - (SLOT + OH + 2 * F)), f32)
    out_ref[...] = jnp.concatenate(
        [slot_log, recon_oh, recon_ce_mean, recon_ce_log_var, pad], axis=-1)


# ---------------- parameter construction (deterministic, BN folded) ----------------
_BN_SCALE = 1.0 / (1.0 + BN_EPS) ** 0.5   # eval BN: gamma=1, beta=0, mean=0, var=1


def _linear_init(key, fan_in, fan_out):
    kw, kb = jax.random.split(key)
    bound = 1.0 / (fan_in ** 0.5)
    w = jax.random.uniform(kw, (fan_in, fan_out), jnp.float32, -bound, bound)
    b = jax.random.uniform(kb, (fan_out,), jnp.float32, -bound, bound)
    return w, b


def _decoder_init(key, fan_in, fan_out):
    # torch: weight.data.uniform_(0, init_mult); bias keeps default init
    kw, kb = jax.random.split(key)
    bound = 1.0 / (fan_in ** 0.5)
    w = jax.random.uniform(kw, (fan_in, fan_out), jnp.float32, 0.0, INIT_MULT)
    b = jax.random.uniform(kb, (fan_out,), jnp.float32, -bound, bound)
    return w, b


def _fold_bn(w, b):
    # y = BN(x @ W + b) with fresh eval stats  ==  x @ (W*s) + (b*s),  s = 1/sqrt(1+eps)
    return w * _BN_SCALE, b * _BN_SCALE


def make_weight_slab(key):
    ks = jax.random.split(key, 10)
    w_oh1, b_oh1 = _linear_init(ks[0], OH, L1)
    w_oh2, b_oh2 = _linear_init(ks[1], L1, L2)
    w_ce1, b_ce1 = _linear_init(ks[2], F, L1)
    w_ce2, b_ce2 = _linear_init(ks[3], L1, L2)
    w_mu, b_mu = _fold_bn(*_linear_init(ks[4], 2 * L2, H))
    w_lv, b_lv = _fold_bn(*_linear_init(ks[5], 2 * L2, H))
    w_zs, b_zs = _linear_init(ks[6], H, SLOT)
    w_doh, b_doh = _fold_bn(*_decoder_init(ks[7], SLOT, OH))
    w_dcm, b_dcm = _fold_bn(*_decoder_init(ks[8], SLOT, F))
    w_dlv, b_dlv = _fold_bn(*_decoder_init(ks[9], SLOT, F))

    # fuse mean|log_var heads and the three decoders along the output dim
    w_head = jnp.concatenate([w_mu, w_lv], axis=1)          # [2*L2, 2*H]
    b_head = jnp.concatenate([b_mu, b_lv], axis=0)          # [2*H]
    w_dec = jnp.concatenate([w_doh, w_dcm, w_dlv], axis=1)  # [SLOT, OH+2F]
    b_dec = jnp.concatenate([b_doh, b_dcm, b_dlv], axis=0)  # [OH+2F]

    slab = jnp.zeros((W_ROWS, W_COLS), jnp.float32)

    def put(s, r0, w, b):
        fi, fo = w.shape
        s = s.at[r0:r0 + fi, :fo].set(w)
        s = s.at[r0 + fi, :fo].set(b)
        return s

    slab = put(slab, R_OH1, w_oh1, b_oh1)
    slab = put(slab, R_OH2, w_oh2, b_oh2)
    slab = put(slab, R_CE1, w_ce1, b_ce1)
    slab = put(slab, R_CE2, w_ce2, b_ce2)
    slab = put(slab, R_HEAD, w_head, b_head)
    slab = put(slab, R_ZS, w_zs, b_zs)
    slab = put(slab, R_DEC, w_dec, b_dec)
    return slab


# ---------------- wrapper ----------------
def dsi_base_forward(oh, ce, mask, eps, w_slab):
    batch = oh.shape[0]
    data = jnp.concatenate([oh, eps, mask], axis=-1)   # [B, OH+H+S]
    vmem = pl.BlockSpec(memory_space=pltpu.MemorySpace.VMEM)
    out = pl.pallas_call(
        dsi_kernel,
        out_shape=jax.ShapeDtypeStruct((batch, OUT_W), jnp.float32),
        in_specs=[vmem, vmem, vmem],
        out_specs=vmem,
    )(data, ce, w_slab)

    slot_log = out[:, :SLOT]
    recon_oh = out[:, SLOT:SLOT + OH]
    recon_ce_mean = out[:, SLOT + OH:SLOT + OH + F]
    recon_ce_log_var = out[:, SLOT + OH + F:SLOT + OH + 2 * F]

    # torch forward (compute_loss=False) returns (domain, slot_log);
    # domain = zeros(batch) is trivial glue done in plain JAX.
    domain = jnp.zeros((batch,), jnp.float32)
    return (domain, slot_log), (recon_oh, recon_ce_mean, recon_ce_log_var)
    # TODO(synk): compute_loss=True branch (MultivariateNormal log_prob + KLD) not implemented.


if __name__ == "__main__":
    key = jax.random.PRNGKey(0)
    k_par, k_oh, k_ce, k_mask, k_eps = jax.random.split(key, 5)

    w_slab = make_weight_slab(k_par)

    oh = jax.random.uniform(k_oh, (B, OH), jnp.float32, 0.0, 3.0)   # count-like
    ce = jax.random.normal(k_ce, (B, S, F), jnp.float32)
    mask = (jax.random.uniform(k_mask, (B, S)) < 0.7).astype(jnp.float32)
    eps = jax.random.normal(k_eps, (B, H), jnp.float32)             # randn_like(mean)

    (domain, slot_log), extras = dsi_base_forward(oh, ce, mask, eps, w_slab)
    jax.block_until_ready((domain, slot_log, extras))

    assert domain.shape == (B,)
    assert slot_log.shape == (B, SLOT)
    assert extras[0].shape == (B, OH)
    assert extras[1].shape == (B, F) and extras[2].shape == (B, F)
    assert not bool(jnp.isnan(slot_log).any())
    assert not bool(jnp.isnan(extras[0]).any())
    print("KERNEL_OK")
</pallas_src>

<mosaic_0001>
module attributes {stable_mosaic.version = 11 : i64} {
  func.func @dsi_kernel(%arg0: memref<8x72xf32, #tpu.memory_space<vmem>>, %arg1: memref<8x8x16xf32, #tpu.memory_space<vmem>>, %arg2: memref<344x64xf32, #tpu.memory_space<vmem>>, %arg3: memref<8x128xf32, #tpu.memory_space<vmem>>) attributes {dimension_semantics = [], scalar_prefetch = 0 : i64, scratch_operands = 0 : i64, tpu.core_type = #tpu.core_type<tc>} {
    %c0 = arith.constant 0 : index
    %c0_0 = arith.constant 0 : index
    %0 = vector.load %arg0[%c0, %c0_0] : memref<8x72xf32, #tpu.memory_space<vmem>>, vector<8x72xf32>
    %1 = vector.extract_strided_slice %0 {offsets = [0, 0], sizes = [8, 32], strides = [1, 1]} : vector<8x72xf32> to vector<8x32xf32>
    %2 = vector.extract_strided_slice %0 {offsets = [0, 32], sizes = [8, 32], strides = [1, 1]} : vector<8x72xf32> to vector<8x32xf32>
    %3 = vector.extract_strided_slice %0 {offsets = [0, 64], sizes = [8, 8], strides = [1, 1]} : vector<8x72xf32> to vector<8x8xf32>
    %c0_1 = arith.constant 0 : index
    %c0_2 = arith.constant 0 : index
    %4 = vector.load %arg2[%c0_1, %c0_2] : memref<344x64xf32, #tpu.memory_space<vmem>>, vector<32x64xf32>
    %c32 = arith.constant 32 : index
    %c0_3 = arith.constant 0 : index
    %5 = vector.load %arg2[%c32, %c0_3] : memref<344x64xf32, #tpu.memory_space<vmem>>, vector<1x64xf32>
    %cst = arith.constant dense<0.000000e+00> : vector<8x64xf32>
    %6 = tpu.matmul %1, %4, %cst {dimension_numbers = #tpu.dot_dimension_numbers<[1], [0], [0], [1], [0, 0, 1, 1], [], []>} : vector<8x32xf32>, vector<32x64xf32>, vector<8x64xf32> -> vector<8x64xf32>
    %7 = vector.broadcast %5 : vector<1x64xf32> to vector<8x64xf32>
    %8 = arith.addf %6, %7 : vector<8x64xf32>
    %cst_4 = arith.constant 0.000000e+00 : f32
    %9 = vector.broadcast %cst_4 : f32 to vector<8x64xf32>
    %10 = arith.maximumf %8, %9 : vector<8x64xf32>
    %11 = math.absf %8 : vector<8x64xf32>
    %cst_5 = arith.constant 0.000000e+00 : f32
    %12 = vector.broadcast %cst_5 : f32 to vector<8x64xf32>
    %13 = arith.subf %12, %11 : vector<8x64xf32>
    %14 = math.exp %13 : vector<8x64xf32>
    %cst_6 = arith.constant 1.000000e+00 : f32
    %15 = vector.broadcast %cst_6 : f32 to vector<8x64xf32>
    %16 = arith.addf %15, %14 : vector<8x64xf32>
    %17 = math.log %16 : vector<8x64xf32>
    %18 = arith.addf %10, %17 : vector<8x64xf32>
    %c40 = arith.constant 40 : index
    %c0_7 = arith.constant 0 : index
    %19 = vector.load %arg2[%c40, %c0_7] : memref<344x64xf32, #tpu.memory_space<vmem>>, vector<64x32xf32>
    %c104 = arith.constant 104 : index
    %c0_8 = arith.constant 0 : index
    %20 = vector.load %arg2[%c104, %c0_8] : memref<344x64xf32, #tpu.memory_space<vmem>>, vector<1x32xf32>
    %cst_9 = arith.constant dense<0.000000e+00> : vector<8x32xf32>
    %21 = tpu.matmul %18, %19, %cst_9 {dimension_numbers = #tpu.dot_dimension_numbers<[1], [0], [0], [1], [0, 0, 1, 1], [], []>} : vector<8x64xf32>, vector<64x32xf32>, vector<8x32xf32> -> vector<8x32xf32>
    %22 = vector.broadcast %20 : vector<1x32xf32> to vector<8x32xf32>
    %23 = arith.addf %21, %22 : vector<8x32xf32>
    %cst_10 = arith.constant 0.000000e+00 : f32
    %24 = vector.broadcast %cst_10 : f32 to vector<8x32xf32>
    %25 = arith.maximumf %23, %24 : vector<8x32xf32>
    %26 = math.absf %23 : vector<8x32xf32>
    %cst_11 = arith.constant 0.000000e+00 : f32
    %27 = vector.broadcast %cst_11 : f32 to vector<8x32xf32>
    %28 = arith.subf %27, %26 : vector<8x32xf32>
    %29 = math.exp %28 : vector<8x32xf32>
    %cst_12 = arith.constant 1.000000e+00 : f32
    %30 = vector.broadcast %cst_12 : f32 to vector<8x32xf32>
    %31 = arith.addf %30, %29 : vector<8x32xf32>
    %32 = math.log %31 : vector<8x32xf32>
    %33 = arith.addf %25, %32 : vector<8x32xf32>
    %c0_13 = arith.constant 0 : index
    %c0_14 = arith.constant 0 : index
    %c0_15 = arith.constant 0 : index
    %34 = vector.load %arg1[%c0_13, %c0_14, %c0_15] : memref<8x8x16xf32, #tpu.memory_space<vmem>>, vector<8x8x16xf32>
    %cst_16 = arith.constant dense<0.000000e+00> : vector<8xf32>
    %35 = vector.multi_reduction <add>, %3, %cst_16 [1] : vector<8x8xf32> to vector<8xf32>
    %36 = vector.shape_cast %35 : vector<8xf32> to vector<8x1xf32>
    %cst_17 = arith.constant 0.000000e+00 : f32
    %37 = vector.broadcast %cst_17 : f32 to vector<8x1xf32>
    %38 = arith.cmpf oeq, %36, %37 : vector<8x1xf32>
    %cst_18 = arith.constant 1.000000e+00 : f32
    %39 = vector.broadcast %cst_18 : f32 to vector<8x1xf32>
    %40 = arith.select %38, %39, %36 : vector<8x1xi1>, vector<8x1xf32>
    %41 = vector.shape_cast %3 : vector<8x8xf32> to vector<8x8x1xf32>
    %42 = vector.broadcast %41 : vector<8x8x1xf32> to vector<8x8x16xf32>
    %43 = arith.mulf %34, %42 : vector<8x8x16xf32>
    %cst_19 = arith.constant dense<0.000000e+00> : vector<8x16xf32>
    %44 = vector.multi_reduction <add>, %43, %cst_19 [1] : vector<8x8x16xf32> to vector<8x16xf32>
    %45 = vector.broadcast %40 : vector<8x1xf32> to vector<8x16xf32>
    %46 = arith.divf %44, %45 : vector<8x16xf32>
    %c112 = arith.constant 112 : index
    %c0_20 = arith.constant 0 : index
    %47 = vector.load %arg2[%c112, %c0_20] : memref<344x64xf32, #tpu.memory_space<vmem>>, vector<16x64xf32>
    %c128 = arith.constant 128 : index
    %c0_21 = arith.constant 0 : index
    %48 = vector.load %arg2[%c128, %c0_21] : memref<344x64xf32, #tpu.memory_space<vmem>>, vector<1x64xf32>
    %cst_22 = arith.constant dense<0.000000e+00> : vector<8x64xf32>
    %49 = tpu.matmul %46, %47, %cst_22 {dimension_numbers = #tpu.dot_dimension_numbers<[1], [0], [0], [1], [0, 0, 1, 1], [], []>} : vector<8x16xf32>, vector<16x64xf32>, vector<8x64xf32> -> vector<8x64xf32>
    %50 = vector.broadcast %48 : vector<1x64xf32> to vector<8x64xf32>
    %51 = arith.addf %49, %50 : vector<8x64xf32>
    %cst_23 = arith.constant 0.000000e+00 : f32
    %52 = vector.broadcast %cst_23 : f32 to vector<8x64xf32>
    %53 = arith.maximumf %51, %52 : vector<8x64xf32>
    %54 = math.absf %51 : vector<8x64xf32>
    %cst_24 = arith.constant 0.000000e+00 : f32
    %55 = vector.broadcast %cst_24 : f32 to vector<8x64xf32>
    %56 = arith.subf %55, %54 : vector<8x64xf32>
    %57 = math.exp %56 : vector<8x64xf32>
    %cst_25 = arith.constant 1.000000e+00 : f32
    %58 = vector.broadcast %cst_25 : f32 to vector<8x64xf32>
    %59 = arith.addf %58, %57 : vector<8x64xf32>
    %60 = math.log %59 : vector<8x64xf32>
    %61 = arith.addf %53, %60 : vector<8x64xf32>
    %c136 = arith.constant 136 : index
    %c0_26 = arith.constant 0 : index
    %62 = vector.load %arg2[%c136, %c0_26] : memref<344x64xf32, #tpu.memory_space<vmem>>, vector<64x32xf32>
    %c200 = arith.constant 200 : index
    %c0_27 = arith.constant 0 : index
    %63 = vector.load %arg2[%c200, %c0_27] : memref<344x64xf32, #tpu.memory_space<vmem>>, vector<1x32xf32>
    %cst_28 = arith.constant dense<0.000000e+00> : vector<8x32xf32>
    %64 = tpu.matmul %61, %62, %cst_28 {dimension_numbers = #tpu.dot_dimension_numbers<[1], [0], [0], [1], [0, 0, 1, 1], [], []>} : vector<8x64xf32>, vector<64x32xf32>, vector<8x32xf32> -> vector<8x32xf32>
    %65 = vector.broadcast %63 : vector<1x32xf32> to vector<8x32xf32>
    %66 = arith.addf %64, %65 : vector<8x32xf32>
    %cst_29 = arith.constant 0.000000e+00 : f32
    %67 = vector.broadcast %cst_29 : f32 to vector<8x32xf32>
    %68 = arith.maximumf %66, %67 : vector<8x32xf32>
    %69 = math.absf %66 : vector<8x32xf32>
    %cst_30 = arith.constant 0.000000e+00 : f32
    %70 = vector.broadcast %cst_30 : f32 to vector<8x32xf32>
    %71 = arith.subf %70, %69 : vector<8x32xf32>
    %72 = math.exp %71 : vector<8x32xf32>
    %cst_31 = arith.constant 1.000000e+00 : f32
    %73 = vector.broadcast %cst_31 : f32 to vector<8x32xf32>
    %74 = arith.addf %73, %72 : vector<8x32xf32>
    %75 = math.log %74 : vector<8x32xf32>
    %76 = arith.addf %68, %75 : vector<8x32xf32>
    %77 = tpu.concatenate %33, %76 in 1 : vector<8x32xf32>, vector<8x32xf32> -> vector<8x64xf32>
    %c208 = arith.constant 208 : index
    %c0_32 = arith.constant 0 : index
    %78 = vector.load %arg2[%c208, %c0_32] : memref<344x64xf32, #tpu.memory_space<vmem>>, vector<64x64xf32>
    %c272 = arith.constant 272 : index
    %c0_33 = arith.constant 0 : index
    %79 = vector.load %arg2[%c272, %c0_33] : memref<344x64xf32, #tpu.memory_space<vmem>>, vector<1x64xf32>
    %cst_34 = arith.constant dense<0.000000e+00> : vector<8x64xf32>
    %80 = tpu.matmul %77, %78, %cst_34 {dimension_numbers = #tpu.dot_dimension_numbers<[1], [0], [0], [1], [0, 0, 1, 1], [], []>} : vector<8x64xf32>, vector<64x64xf32>, vector<8x64xf32> -> vector<8x64xf32>
    %81 = vector.broadcast %79 : vector<1x64xf32> to vector<8x64xf32>
    %82 = arith.addf %80, %81 : vector<8x64xf32>
    %83 = vector.extract_strided_slice %82 {offsets = [0, 0], sizes = [8, 32], strides = [1, 1]} : vector<8x64xf32> to vector<8x32xf32>
    %84 = vector.extract_strided_slice %82 {offsets = [0, 32], sizes = [8, 32], strides = [1, 1]} : vector<8x64xf32> to vector<8x32xf32>
    %cst_35 = arith.constant 5.000000e-01 : f32
    %85 = vector.broadcast %cst_35 : f32 to vector<8x32xf32>
    %86 = arith.mulf %84, %85 : vector<8x32xf32>
    %87 = math.exp %86 : vector<8x32xf32>
    %88 = arith.mulf %87, %2 : vector<8x32xf32>
    %89 = arith.addf %83, %88 : vector<8x32xf32>
    %c280 = arith.constant 280 : index
    %c0_36 = arith.constant 0 : index
    %90 = vector.load %arg2[%c280, %c0_36] : memref<344x64xf32, #tpu.memory_space<vmem>>, vector<32x16xf32>
    %c312 = arith.constant 312 : index
    %c0_37 = arith.constant 0 : index
    %91 = vector.load %arg2[%c312, %c0_37] : memref<344x64xf32, #tpu.memory_space<vmem>>, vector<1x16xf32>
    %cst_38 = arith.constant dense<0.000000e+00> : vector<8x16xf32>
    %92 = tpu.matmul %89, %90, %cst_38 {dimension_numbers = #tpu.dot_dimension_numbers<[1], [0], [0], [1], [0, 0, 1, 1], [], []>} : vector<8x32xf32>, vector<32x16xf32>, vector<8x16xf32> -> vector<8x16xf32>
    %93 = vector.broadcast %91 : vector<1x16xf32> to vector<8x16xf32>
    %94 = arith.addf %92, %93 : vector<8x16xf32>
    %cst_39 = arith.constant dense<0xFF800000> : vector<8xf32>
    %95 = vector.multi_reduction <maximumf>, %94, %cst_39 [1] : vector<8x16xf32> to vector<8xf32>
    %96 = vector.shape_cast %95 : vector<8xf32> to vector<8x1xf32>
    %97 = vector.broadcast %96 : vector<8x1xf32> to vector<8x16xf32>
    %98 = arith.subf %94, %97 : vector<8x16xf32>
    %99 = math.exp %98 : vector<8x16xf32>
    %cst_40 = arith.constant dense<0.000000e+00> : vector<8xf32>
    %100 = vector.multi_reduction <add>, %99, %cst_40 [1] : vector<8x16xf32> to vector<8xf32>
    %101 = vector.shape_cast %100 : vector<8xf32> to vector<8x1xf32>
    %102 = tpu.reciprocal %101 {approx = true} : vector<8x1xf32> -> vector<8x1xf32>
    %103 = vector.broadcast %102 : vector<8x1xf32> to vector<8x16xf32>
    %104 = arith.mulf %99, %103 : vector<8x16xf32>
    %c320 = arith.constant 320 : index
    %c0_41 = arith.constant 0 : index
    %105 = vector.load %arg2[%c320, %c0_41] : memref<344x64xf32, #tpu.memory_space<vmem>>, vector<16x64xf32>
    %c336 = arith.constant 336 : index
    %c0_42 = arith.constant 0 : index
    %106 = vector.load %arg2[%c336, %c0_42] : memref<344x64xf32, #tpu.memory_space<vmem>>, vector<1x64xf32>
    %cst_43 = arith.constant dense<0.000000e+00> : vector<8x64xf32>
    %107 = tpu.matmul %104, %105, %cst_43 {dimension_numbers = #tpu.dot_dimension_numbers<[1], [0], [0], [1], [0, 0, 1, 1], [], []>} : vector<8x16xf32>, vector<16x64xf32>, vector<8x64xf32> -> vector<8x64xf32>
    %108 = vector.broadcast %106 : vector<1x64xf32> to vector<8x64xf32>
    %109 = arith.addf %107, %108 : vector<8x64xf32>
    %110 = vector.extract_strided_slice %109 {offsets = [0, 0], sizes = [8, 32], strides = [1, 1]} : vector<8x64xf32> to vector<8x32xf32>
    %cst_44 = arith.constant dense<0xFF800000> : vector<8xf32>
    %111 = vector.multi_reduction <maximumf>, %110, %cst_44 [1] : vector<8x32xf32> to vector<8xf32>
    %112 = vector.shape_cast %111 : vector<8xf32> to vector<8x1xf32>
    %113 = vector.broadcast %112 : vector<8x1xf32> to vector<8x32xf32>
    %114 = arith.subf %110, %113 : vector<8x32xf32>
    %115 = math.exp %114 : vector<8x32xf32>
    %cst_45 = arith.constant dense<0.000000e+00> : vector<8xf32>
    %116 = vector.multi_reduction <add>, %115, %cst_45 [1] : vector<8x32xf32> to vector<8xf32>
    %117 = vector.shape_cast %116 : vector<8xf32> to vector<8x1xf32>
    %118 = tpu.reciprocal %117 {approx = true} : vector<8x1xf32> -> vector<8x1xf32>
    %119 = vector.broadcast %118 : vector<8x1xf32> to vector<8x32xf32>
    %120 = arith.mulf %115, %119 : vector<8x32xf32>
    %121 = vector.extract_strided_slice %109 {offsets = [0, 32], sizes = [8, 16], strides = [1, 1]} : vector<8x64xf32> to vector<8x16xf32>
    %122 = vector.extract_strided_slice %109 {offsets = [0, 48], sizes = [8, 16], strides = [1, 1]} : vector<8x64xf32> to vector<8x16xf32>
    %cst_46 = arith.constant 1.000000e-10 : f32
    %123 = vector.broadcast %cst_46 : f32 to vector<8x16xf32>
    %124 = arith.addf %104, %123 : vector<8x16xf32>
    %125 = math.log %124 : vector<8x16xf32>
    %cst_47 = arith.constant 0.000000e+00 : f32
    %126 = vector.broadcast %cst_47 : f32 to vector<8x48xf32>
    %127 = tpu.concatenate %125, %120, %121, %122, %126 in 1 : vector<8x16xf32>, vector<8x32xf32>, vector<8x16xf32>, vector<8x16xf32>, vector<8x48xf32> -> vector<8x128xf32>
    %c0_48 = arith.constant 0 : index
    %c0_49 = arith.constant 0 : index
    %128 = vector.load %arg3[%c0_48, %c0_49] : memref<8x128xf32, #tpu.memory_space<vmem>>, vector<8x128xf32>
    tpu.vector_store %arg3[%c0_48, %c0_49], %127 {strides = array<i32>} : memref<8x128xf32, #tpu.memory_space<vmem>>, vector<8x128xf32>,
    return
  }
}

</mosaic_0001>

<llo_original>
// kernel: tpu_custom_call.1
$region0: #{tpu_custom_call.1}
  #allocation0 [shape = 'u32[]', space=smem, size = 0x4, offset = 0x4, fixed_abs, tag = 'smem constant byte address 0x4 - core index']
  #allocation1 [shape = 'u32[144,128]{1,0:T(1,128)}', space=vmem, size = 0x12000, scoped, tag = 'internal scratch']
  %s0 = inlined_call_operand.vmem [shape: f32[8,72], index: 0, kind: input, shape index: {}]
  %s1 = inlined_call_operand.vmem [shape: f32[8,8,16], index: 1, kind: input, shape index: {}]
  %s2 = inlined_call_operand.vmem [shape: f32[344,64], index: 2, kind: input, shape index: {}]
  %s3 = inlined_call_operand.hbm [shape: f32[8,128], index: 3, kind: output, shape index: {}]
  %s4 = sld [smem:[#allocation0]]
  $region22: #{tpu_custom_call.1} parent=0
    _
  %s6 = ssub.s32 1, %s4
  %s7 = scalar_select 0, %s6, %s4
  $region1: #{tpu_custom_call.1} parent=0
    #allocation2 [shape = 'u8[4096]{0}', space=vmem, size = 0x1000, scoped, tag = 'output window, operand 0, single buffered']
    #allocation3 [shape = 's32[1]{0}', space=sflag, size = 0x4, scoped, tag = 'scoped memory for tpu_custom_call.1']
    %8 = vsyncpa [#allocation3], 0
    // Predicated region
    $region2: #{tpu_custom_call.1} parent=1 // pred_check
      _
    $region3: #{tpu_custom_call.1} parent=1 // pred_check_branch
      %10 = sbr.rel (0) target = $region5
    $region4: #{tpu_custom_call.1} parent=1 // pred_region
      _
    $region5: #{tpu_custom_call.1} parent=1 // pred_fallthru
      _
    // Predicated region
    $region6: #{tpu_custom_call.1} parent=1 // pred_check
      _
    $region7: #{tpu_custom_call.1} parent=1 // pred_check_branch
      %12 = sbr.rel (0) target = $region9
    $region8: #{tpu_custom_call.1} parent=1 // pred_region
      _
    $region9: #{tpu_custom_call.1} parent=1 // pred_fallthru
      _
    // Predicated region
    $region10: #{tpu_custom_call.1} parent=1 // pred_check
      _
    $region11: #{tpu_custom_call.1} parent=1 // pred_check_branch
      %14 = sbr.rel (0) target = $region13
    $region12: #{tpu_custom_call.1} parent=1 // pred_region
      _
    $region13: #{tpu_custom_call.1} parent=1 // pred_fallthru
      _
    %v15 = vld [vmem:[%s0] sm:$0xff]
    %v16 = vld [vmem:[%s2] sm:$0xff]
    %v17 = vld [vmem:[%s2 + $0x8] sm:$0xff]
    %v18 = vld [vmem:[%s2 + $0x10] sm:$0xff]
    %v19 = vld [vmem:[%s2 + $0x18] sm:$0xff]
    %v20 = vld [vmem:[%s2 + $0x20] sm:$0x1]
    %v21 = vlaneseq
    %v22 = vshrl.u32 %v21, 7
    %v23 = vsub.s32 0, %v22
    %v24 = vrot.slane %v20, %v23
    %vm25 = vcmask 261120
    %v27 = vsel %vm25, %v15, 0
    %29 = vmatprep.subr.mxu0 0.0
    %30 = vmatpush1.msra.mxu0 0.0
    %31 = vmatprep.subr.mxu0 0.0
    %32 = vmatpush1.msra.mxu0 0.0
    %33 = vmatprep.subr.mxu0 0.0
    %34 = vmatpush1.msra.mxu0 0.0
    %35 = vmatprep.subr.mxu0 0.0
    %36 = vmatpush1.msra.mxu0 0.0
    %37 = vmatprep.subr.mxu0 0.0
    %38 = vmatpush1.msra.mxu0 0.0
    %39 = vmatprep.subr.mxu0 0.0
    %40 = vmatpush1.msra.mxu0 0.0
    %41 = vmatprep.subr.mxu0 0.0
    %42 = vmatpush1.msra.mxu0 0.0
    %43 = vmatprep.subr.mxu0 0.0
    %44 = vmatpush1.msra.mxu0 0.0
    %45 = vmatprep.subr.mxu0 0.0
    %46 = vmatpush1.msra.mxu0 0.0
    %47 = vmatprep.subr.mxu0 0.0
    %48 = vmatpush1.msra.mxu0 0.0
    %49 = vmatprep.subr.mxu0 0.0
    %50 = vmatpush1.msra.mxu0 0.0
    %51 = vmatprep.subr.mxu0 0.0
    %52 = vmatpush1.msra.mxu0 0.0
    %53 = vmatprep.subr.mxu0 0.0
    %54 = vmatpush1.msra.mxu0 %v19
    %55 = vmatprep.subr.mxu0 0.0
    %56 = vmatpush1.msra.mxu0 %v18
    %57 = vmatprep.subr.mxu0 0.0
    %58 = vmatpush1.msra.mxu0 %v17
    %59 = vmatprep.subr.mxu0 0.0
    %60 = vmatpush1.msra.mxu0 %v16
    %61 = vmatprep.subr.mxu0 0.0
    %62 = vmatpush2.msra.mxu0 0.0
    %63 = vmatprep.subr.mxu0 0.0
    %64 = vmatpush2.msra.mxu0 0.0
    %65 = vmatprep.subr.mxu0 0.0
    %66 = vmatpush2.msra.mxu0 0.0
    %67 = vmatprep.subr.mxu0 0.0
    %68 = vmatpush2.msra.mxu0 0.0
    %69 = vmatprep.subr.mxu0 0.0
    %70 = vmatpush2.msra.mxu0 0.0
    %71 = vmatprep.subr.mxu0 0.0
    %72 = vmatpush2.msra.mxu0 0.0
    %73 = vmatprep.subr.mxu0 0.0
    %74 = vmatpush2.msra.mxu0 0.0
    %75 = vmatprep.subr.mxu0 0.0
    %76 = vmatpush2.msra.mxu0 0.0
    %77 = vmatprep.subr.mxu0 0.0
    %78 = vmatpush2.msra.mxu0 0.0
    %79 = vmatprep.subr.mxu0 0.0
    %80 = vmatpush2.msra.mxu0 0.0
    %81 = vmatprep.subr.mxu0 0.0
    %82 = vmatpush2.msra.mxu0 0.0
    %83 = vmatprep.subr.mxu0 0.0
    %84 = vmatpush2.msra.mxu0 0.0
    %85 = vmatprep.subr.mxu0 0.0
    %86 = vmatpush2.msra.mxu0 0.0
    %87 = vmatprep.subr.mxu0 0.0
    %88 = vmatpush2.msra.mxu0 0.0
    %89 = vmatprep.subr.mxu0 0.0
    %90 = vmatpush2.msra.mxu0 0.0
    %91 = vmatprep.subr.mxu0 0.0
    %92 = vmatpush2.msra.mxu0 0.0
    %93 = vmatprep.mubr.f32.mxu0 0.0
    %94 = vmatmul.mubr.f32.gmra.mxu0 %v27
    %v95 = vpop.f32.mrf.mxu0
    %v96 = vadd.f32 %v24, %v95
    %v97 = vpop.f32.mrf.mxu0
    %98 = vdwg.mxu0
    %v99 = vmax.f32 %v96, 0.0
    %v100 = vand.u32 2147483647, %v96
    %v101 = vsub.f32 0.0, %v100
    %v102 = vmul.f32 %v101, 1.442695
    %v103 = vpow.pop %v102
    %v104 = vadd.f32 %v103, 1.0
    %v105 = vlog2.pop %v104
    %v106 = vmul.f32 %v105, 0.6931472
    %v107 = vadd.f32 %v99, %v106
    %v108 = vld [vmem:[%s2 + $0x28] sm:$0xff]
    %v109 = vld [vmem:[%s2 + $0x30] sm:$0xff]
    %v110 = vld [vmem:[%s2 + $0x38] sm:$0xff]
    %v111 = vld [vmem:[%s2 + $0x40] sm:$0xff]
    %v112 = vld [vmem:[%s2 + $0x48] sm:$0xff]
    %v113 = vld [vmem:[%s2 + $0x50] sm:$0xff]
    %v114 = vld [vmem:[%s2 + $0x58] sm:$0xff]
    %v115 = vld [vmem:[%s2 + $0x60] sm:$0xff]
    %v116 = vld [vmem:[%s2 + $0x68] sm:$0x1]
    %v117 = vlaneseq
    %v118 = vshrl.u32 %v117, 7
    %v119 = vsub.s32 0, %v118
    %v120 = vrot.slane %v116, %v119
    %vm121 = vcmask 523264
    %v123 = vsel %vm121, %v107, 0
    %125 = vmatprep.subr.mxu0 0.0
    %126 = vmatpush1.msra.mxu0 0.0
    %127 = vmatprep.subr.mxu0 0.0
    %128 = vmatpush1.msra.mxu0 0.0
    %129 = vmatprep.subr.mxu0 0.0
    %130 = vmatpush1.msra.mxu0 0.0
    %131 = vmatprep.subr.mxu0 0.0
    %132 = vmatpush1.msra.mxu0 0.0
    %133 = vmatprep.subr.mxu0 0.0
    %134 = vmatpush1.msra.mxu0 0.0
    %135 = vmatprep.subr.mxu0 0.0
    %136 = vmatpush1.msra.mxu0 0.0
    %137 = vmatprep.subr.mxu0 0.0
    %138 = vmatpush1.msra.mxu0 0.0
    %139 = vmatprep.subr.mxu0 0.0
    %140 = vmatpush1.msra.mxu0 0.0
    %141 = vmatprep.subr.mxu0 0.0
    %142 = vmatpush1.msra.mxu0 %v115
    %143 = vmatprep.subr.mxu0 0.0
    %144 = vmatpush1.msra.mxu0 %v114
    %145 = vmatprep.subr.mxu0 0.0
    %146 = vmatpush1.msra.mxu0 %v113
    %147 = vmatprep.subr.mxu0 0.0
    %148 = vmatpush1.msra.mxu0 %v112
    %149 = vmatprep.subr.mxu0 0.0
    %150 = vmatpush1.msra.mxu0 %v111
    %151 = vmatprep.subr.mxu0 0.0
    %152 = vmatpush1.msra.mxu0 %v110
    %153 = vmatprep.subr.mxu0 0.0
    %154 = vmatpush1.msra.mxu0 %v109
    %155 = vmatprep.subr.mxu0 0.0
    %156 = vmatpush1.msra.mxu0 %v108
    %157 = vmatprep.subr.mxu0 0.0
    %158 = vmatpush2.msra.mxu0 0.0
    %159 = vmatprep.subr.mxu0 0.0
    %160 = vmatpush2.msra.mxu0 0.0
    %161 = vmatprep.subr.mxu0 0.0
    %162 = vmatpush2.msra.mxu0 0.0
    %163 = vmatprep.subr.mxu0 0.0
    %164 = vmatpush2.msra.mxu0 0.0
    %165 = vmatprep.subr.mxu0 0.0
    %166 = vmatpush2.msra.mxu0 0.0
    %167 = vmatprep.subr.mxu0 0.0
    %168 = vmatpush2.msra.mxu0 0.0
    %169 = vmatprep.subr.mxu0 0.0
    %170 = vmatpush2.msra.mxu0 0.0
    %171 = vmatprep.subr.mxu0 0.0
    %172 = vmatpush2.msra.mxu0 0.0
    %173 = vmatprep.subr.mxu0 0.0
    %174 = vmatpush2.msra.mxu0 0.0
    %175 = vmatprep.subr.mxu0 0.0
    %176 = vmatpush2.msra.mxu0 0.0
    %177 = vmatprep.subr.mxu0 0.0
    %178 = vmatpush2.msra.mxu0 0.0
    %179 = vmatprep.subr.mxu0 0.0
    %180 = vmatpush2.msra.mxu0 0.0
    %181 = vmatprep.subr.mxu0 0.0
    %182 = vmatpush2.msra.mxu0 0.0
    %183 = vmatprep.subr.mxu0 0.0
    %184 = vmatpush2.msra.mxu0 0.0
    %185 = vmatprep.subr.mxu0 0.0
    %186 = vmatpush2.msra.mxu0 0.0
    %187 = vmatprep.subr.mxu0 0.0
    %188 = vmatpush2.msra.mxu0 0.0
    %189 = vmatprep.mubr.f32.mxu0 0.0
    %190 = vmatmul.mubr.f32.gmra.mxu0 %v123
    %v191 = vpop.f32.mrf.mxu0
    %v192 = vadd.f32 %v120, %v191
    %v193 = vpop.f32.mrf.mxu0
    %194 = vdwg.mxu0
    %v195 = vmax.f32 %v192, 0.0
    %v196 = vand.u32 2147483647, %v192
    %v197 = vsub.f32 0.0, %v196
    %v198 = vmul.f32 %v197, 1.442695
    %v199 = vpow.pop %v198
    %v200 = vadd.f32 %v199, 1.0
    %v201 = vlog2.pop %v200
    %v202 = vmul.f32 %v201, 0.6931472
    %v203 = vadd.f32 %v195, %v202
    %v204 = vld [vmem:[%s1] sm:$0xff]
    %v205 = vld [vmem:[%s1 + $0x8] sm:$0xff]
    %v206 = vld [vmem:[%s1 + $0x10] sm:$0xff]
    %v207 = vld [vmem:[%s1 + $0x18] sm:$0xff]
    %v208 = vld [vmem:[%s1 + $0x20] sm:$0xff]
    %v209 = vld [vmem:[%s1 + $0x28] sm:$0xff]
    %v210 = vld [vmem:[%s1 + $0x30] sm:$0xff]
    %v211 = vld [vmem:[%s1 + $0x38] sm:$0xff]
    %212 = vrot.lane.b32.xlu0 %v15, 64
    %v213 = vpop.permute.xlu0 %212
    %vm215 = vcmask 64512
    %v216 = vsel %vm215, %v213, 0.0
    %217 = vadd.xlane.f32.xlu0 %v216
    %v218 = vpop.xlane.xlu0 %217
    %vm219 = vcmp.eq.f32.partialorder %v218, 0.0
    %v220 = vsel %vm219, 1.0, %v218
    %v221 = vlaneseq
    %v222 = vshrl.u32 %v221, 7
    %v223 = vsub.s32 0, %v222
    %v224 = vrot.slane %v15, %v223
    %s226 = sor.u32 256, 64
    %227 = vbcast.lane.b32.xlu0 %v224, %s226
    %v228 = vpop.permute.xlu0 %227
    %v229 = vlaneseq
    %v230 = vshrl.u32 %v229, 7
    %v231 = vsub.s32 1, %v230
    %v232 = vrot.slane %v15, %v231
    %s234 = sor.u32 256, 64
    %235 = vbcast.lane.b32.xlu0 %v232, %s234
    %v236 = vpop.permute.xlu0 %235
    %v237 = vlaneseq
    %v238 = vshrl.u32 %v237, 7
    %v239 = vsub.s32 2, %v238
    %v240 = vrot.slane %v15, %v239
    %s242 = sor.u32 256, 64
    %243 = vbcast.lane.b32.xlu0 %v240, %s242
    %v244 = vpop.permute.xlu0 %243
    %v245 = vlaneseq
    %v246 = vshrl.u32 %v245, 7
    %v247 = vsub.s32 3, %v246
    %v248 = vrot.slane %v15, %v247
    %s250 = sor.u32 256, 64
    %251 = vbcast.lane.b32.xlu0 %v248, %s250
    %v252 = vpop.permute.xlu0 %251
    %v253 = vlaneseq
    %v254 = vshrl.u32 %v253, 7
    %v255 = vsub.s32 4, %v254
    %v256 = vrot.slane %v15, %v255
    %s258 = sor.u32 256, 64
    %259 = vbcast.lane.b32.xlu0 %v256, %s258
    %v260 = vpop.permute.xlu0 %259
    %v261 = vlaneseq
    %v262 = vshrl.u32 %v261, 7
    %v263 = vsub.s32 5, %v262
    %v264 = vrot.slane %v15, %v263
    %s266 = sor.u32 256, 64
    %267 = vbcast.lane.b32.xlu0 %v264, %s266
    %v268 = vpop.permute.xlu0 %267
    %v269 = vlaneseq
    %v270 = vshrl.u32 %v269, 7
    %v271 = vsub.s32 6, %v270
    %v272 = vrot.slane %v15, %v271
    %s274 = sor.u32 256, 64
    %275 = vbcast.lane.b32.xlu0 %v272, %s274
    %v276 = vpop.permute.xlu0 %275
    %v277 = vlaneseq
    %v278 = vshrl.u32 %v277, 7
    %v279 = vsub.s32 7, %v278
    %v280 = vrot.slane %v15, %v279
    %s282 = sor.u32 256, 64
    %283 = vbcast.lane.b32.xlu0 %v280, %s282
    %v284 = vpop.permute.xlu0 %283
    %v285 = vmul.f32 %v204, %v228
    %v286 = vmul.f32 %v205, %v236
    %v287 = vmul.f32 %v206, %v244
    %v288 = vmul.f32 %v207, %v252
    %v289 = vmul.f32 %v208, %v260
    %v290 = vmul.f32 %v209, %v268
    %v291 = vmul.f32 %v210, %v276
    %v292 = vmul.f32 %v211, %v284
    %vm293 = vcmask 130048
    %v294 = vsel %vm293, %v285, 0.0
    %v295 = vrot.slane %v294, 4
    %v296 = vadd.f32 %v294, %v295
    %v297 = vrot.slane %v296, 2
    %v298 = vadd.f32 %v296, %v297
    %v299 = vrot.slane %v298, 1
    %v300 = vadd.f32 %v298, %v299
    %v301 = vsel %vm293, %v286, 0.0
    %v302 = vrot.slane %v301, 4
    %v303 = vadd.f32 %v301, %v302
    %v304 = vrot.slane %v303, 2
    %v305 = vadd.f32 %v303, %v304
    %v306 = vrot.slane %v305, 1
    %v307 = vadd.f32 %v305, %v306
    %v308 = vsel %vm293, %v287, 0.0
    %v309 = vrot.slane %v308, 4
    %v310 = vadd.f32 %v308, %v309
    %v311 = vrot.slane %v310, 2
    %v312 = vadd.f32 %v310, %v311
    %v313 = vrot.slane %v312, 1
    %v314 = vadd.f32 %v312, %v313
    %v315 = vsel %vm293, %v288, 0.0
    %v316 = vrot.slane %v315, 4
    %v317 = vadd.f32 %v315, %v316
    %v318 = vrot.slane %v317, 2
    %v319 = vadd.f32 %v317, %v318
    %v320 = vrot.slane %v319, 1
    %v321 = vadd.f32 %v319, %v320
    %v322 = vsel %vm293, %v289, 0.0
    %v323 = vrot.slane %v322, 4
    %v324 = vadd.f32 %v322, %v323
    %v325 = vrot.slane %v324, 2
    %v326 = vadd.f32 %v324, %v325
    %v327 = vrot.slane %v326, 1
    %v328 = vadd.f32 %v326, %v327
    %v329 = vsel %vm293, %v290, 0.0
    %v330 = vrot.slane %v329, 4
    %v331 = vadd.f32 %v329, %v330
    %v332 = vrot.slane %v331, 2
    %v333 = vadd.f32 %v331, %v332
    %v334 = vrot.slane %v333, 1
    %v335 = vadd.f32 %v333, %v334
    %v336 = vsel %vm293, %v291, 0.0
    %v337 = vrot.slane %v336, 4
    %v338 = vadd.f32 %v336, %v337
    %v339 = vrot.slane %v338, 2
    %v340 = vadd.f32 %v338, %v339
    %v341 = vrot.slane %v340, 1
    %v342 = vadd.f32 %v340, %v341
    %v343 = vsel %vm293, %v292, 0.0
    %v344 = vrot.slane %v343, 4
    %v345 = vadd.f32 %v343, %v344
    %v346 = vrot.slane %v345, 2
    %v347 = vadd.f32 %v345, %v346
    %v348 = vrot.slane %v347, 1
    %v349 = vadd.f32 %v347, %v348
    %v351 = vrot.slane %v220, 1
    %v352 = vrot.slane %v220, 2
    %v353 = vrot.slane %v220, 3
    %v354 = vrot.slane %v220, 4
    %v355 = vrot.slane %v220, 5
    %v356 = vrot.slane %v220, 6
    %v357 = vrot.slane %v220, 7
    %v366 = vrcp.pop %v220
    %v367 = vmul.f32 %v300, %v366
    %v368 = vrcp.pop %v351
    %v369 = vmul.f32 %v307, %v368
    %v370 = vrcp.pop %v352
    %v371 = vmul.f32 %v314, %v370
    %v372 = vrcp.pop %v353
    %v373 = vmul.f32 %v321, %v372
    %v374 = vrcp.pop %v354
    %v375 = vmul.f32 %v328, %v374
    %v376 = vrcp.pop %v355
    %v377 = vmul.f32 %v335, %v376
    %v378 = vrcp.pop %v356
    %v379 = vmul.f32 %v342, %v378
    %v380 = vrcp.pop %v357
    %v381 = vmul.f32 %v349, %v380
    %v382 = vld [vmem:[%s2 + $0x70] sm:$0xff]
    %v383 = vld [vmem:[%s2 + $0x78] sm:$0xff]
    %v384 = vld [vmem:[%s2 + $0x80] sm:$0x1]
    %v385 = vlaneseq
    %v386 = vshrl.u32 %v385, 7
    %v387 = vsub.s32 0, %v386
    %v388 = vrot.slane %v384, %v387
    %v397 = vrot.slane %v369, 7
    %vm398 = vcmask 1041409
    %v399 = vsel %vm398, %v397, %v367
    %v400 = vrot.slane %v371, 6
    %vm401 = vcmask 1042434
    %v402 = vsel %vm401, %v400, %v399
    %v403 = vrot.slane %v373, 5
    %vm404 = vcmask 1043459
    %v405 = vsel %vm404, %v403, %v402
    %v406 = vrot.slane %v375, 4
    %vm407 = vcmask 1044484
    %v408 = vsel %vm407, %v406, %v405
    %v409 = vrot.slane %v377, 3
    %vm410 = vcmask 1045509
    %v411 = vsel %vm410, %v409, %v408
    %v412 = vrot.slane %v379, 2
    %vm413 = vcmask 1046534
    %v414 = vsel %vm413, %v412, %v411
    %v415 = vrot.slane %v381, 1
    %vm416 = vcmask 1047559
    %v417 = vsel %vm416, %v415, %v414
    %v418 = vsel %vm293, %v417, 0
    %420 = vmatprep.subr.mxu0 0.0
    %421 = vmatpush1.msra.mxu0 0.0
    %422 = vmatprep.subr.mxu0 0.0
    %423 = vmatpush1.msra.mxu0 0.0
    %424 = vmatprep.subr.mxu0 0.0
    %425 = vmatpush1.msra.mxu0 0.0
    %426 = vmatprep.subr.mxu0 0.0
    %427 = vmatpush1.msra.mxu0 0.0
    %428 = vmatprep.subr.mxu0 0.0
    %429 = vmatpush1.msra.mxu0 0.0
    %430 = vmatprep.subr.mxu0 0.0
    %431 = vmatpush1.msra.mxu0 0.0
    %432 = vmatprep.subr.mxu0 0.0
    %433 = vmatpush1.msra.mxu0 0.0
    %434 = vmatprep.subr.mxu0 0.0
    %435 = vmatpush1.msra.mxu0 0.0
    %436 = vmatprep.subr.mxu0 0.0
    %437 = vmatpush1.msra.mxu0 0.0
    %438 = vmatprep.subr.mxu0 0.0
    %439 = vmatpush1.msra.mxu0 0.0
    %440 = vmatprep.subr.mxu0 0.0
    %441 = vmatpush1.msra.mxu0 0.0
    %442 = vmatprep.subr.mxu0 0.0
    %443 = vmatpush1.msra.mxu0 0.0
    %444 = vmatprep.subr.mxu0 0.0
    %445 = vmatpush1.msra.mxu0 0.0
    %446 = vmatprep.subr.mxu0 0.0
    %447 = vmatpush1.msra.mxu0 0.0
    %448 = vmatprep.subr.mxu0 0.0
    %449 = vmatpush1.msra.mxu0 %v383
    %450 = vmatprep.subr.mxu0 0.0
    %451 = vmatpush1.msra.mxu0 %v382
    %452 = vmatprep.subr.mxu0 0.0
    %453 = vmatpush2.msra.mxu0 0.0
    %454 = vmatprep.subr.mxu0 0.0
    %455 = vmatpush2.msra.mxu0 0.0
    %456 = vmatprep.subr.mxu0 0.0
    %457 = vmatpush2.msra.mxu0 0.0
    %458 = vmatprep.subr.mxu0 0.0
    %459 = vmatpush2.msra.mxu0 0.0
    %460 = vmatprep.subr.mxu0 0.0
    %461 = vmatpush2.msra.mxu0 0.0
    %462 = vmatprep.subr.mxu0 0.0
    %463 = vmatpush2.msra.mxu0 0.0
    %464 = vmatprep.subr.mxu0 0.0
    %465 = vmatpush2.msra.mxu0 0.0
    %466 = vmatprep.subr.mxu0 0.0
    %467 = vmatpush2.msra.mxu0 0.0
    %468 = vmatprep.subr.mxu0 0.0
    %469 = vmatpush2.msra.mxu0 0.0
    %470 = vmatprep.subr.mxu0 0.0
    %471 = vmatpush2.msra.mxu0 0.0
    %472 = vmatprep.subr.mxu0 0.0
    %473 = vmatpush2.msra.mxu0 0.0
    %474 = vmatprep.subr.mxu0 0.0
    %475 = vmatpush2.msra.mxu0 0.0
    %476 = vmatprep.subr.mxu0 0.0
    %477 = vmatpush2.msra.mxu0 0.0
    %478 = vmatprep.subr.mxu0 0.0
    %479 = vmatpush2.msra.mxu0 0.0
    %480 = vmatprep.subr.mxu0 0.0
    %481 = vmatpush2.msra.mxu0 0.0
    %482 = vmatprep.subr.mxu0 0.0
    %483 = vmatpush2.msra.mxu0 0.0
    %484 = vmatprep.mubr.f32.mxu0 0.0
    %485 = vmatmul.mubr.f32.gmra.mxu0 %v418
    %v486 = vpop.f32.mrf.mxu0
    %v487 = vadd.f32 %v388, %v486
    %v488 = vpop.f32.mrf.mxu0
    %489 = vdwg.mxu0
    %v490 = vmax.f32 %v487, 0.0
    %v491 = vand.u32 2147483647, %v487
    %v492 = vsub.f32 0.0, %v491
    %v493 = vmul.f32 %v492, 1.442695
    %v494 = vpow.pop %v493
    %v495 = vadd.f32 %v494, 1.0
    %v496 = vlog2.pop %v495
    %v497 = vmul.f32 %v496, 0.6931472
    %v498 = vadd.f32 %v490, %v497
    %v499 = vld [vmem:[%s2 + $0x88] sm:$0xff]
    %v500 = vld [vmem:[%s2 + $0x90] sm:$0xff]
    %v501 = vld [vmem:[%s2 + $0x98] sm:$0xff]
    %v502 = vld [vmem:[%s2 + $0xa0] sm:$0xff]
    %v503 = vld [vmem:[%s2 + $0xa8] sm:$0xff]
    %v504 = vld [vmem:[%s2 + $0xb0] sm:$0xff]
    %v505 = vld [vmem:[%s2 + $0xb8] sm:$0xff]
    %v506 = vld [vmem:[%s2 + $0xc0] sm:$0xff]
    %v507 = vld [vmem:[%s2 + $0xc8] sm:$0x1]
    %v508 = vlaneseq
    %v509 = vshrl.u32 %v508, 7
    %v510 = vsub.s32 0, %v509
    %v511 = vrot.slane %v507, %v510
    %v513 = vsel %vm121, %v498, 0
    %515 = vmatprep.subr.mxu0 0.0
    %516 = vmatpush1.msra.mxu0 0.0
    %517 = vmatprep.subr.mxu0 0.0
    %518 = vmatpush1.msra.mxu0 0.0
    %519 = vmatprep.subr.mxu0 0.0
    %520 = vmatpush1.msra.mxu0 0.0
    %521 = vmatprep.subr.mxu0 0.0
    %522 = vmatpush1.msra.mxu0 0.0
    %523 = vmatprep.subr.mxu0 0.0
    %524 = vmatpush1.msra.mxu0 0.0
    %525 = vmatprep.subr.mxu0 0.0
    %526 = vmatpush1.msra.mxu0 0.0
    %527 = vmatprep.subr.mxu0 0.0
    %528 = vmatpush1.msra.mxu0 0.0
    %529 = vmatprep.subr.mxu0 0.0
    %530 = vmatpush1.msra.mxu0 0.0
    %531 = vmatprep.subr.mxu0 0.0
    %532 = vmatpush1.msra.mxu0 %v506
    %533 = vmatprep.subr.mxu0 0.0
    %534 = vmatpush1.msra.mxu0 %v505
    %535 = vmatprep.subr.mxu0 0.0
    %536 = vmatpush1.msra.mxu0 %v504
    %537 = vmatprep.subr.mxu0 0.0
    %538 = vmatpush1.msra.mxu0 %v503
    %539 = vmatprep.subr.mxu0 0.0
    %540 = vmatpush1.msra.mxu0 %v502
    %541 = vmatprep.subr.mxu0 0.0
    %542 = vmatpush1.msra.mxu0 %v501
    %543 = vmatprep.subr.mxu0 0.0
    %544 = vmatpush1.msra.mxu0 %v500
    %545 = vmatprep.subr.mxu0 0.0
    %546 = vmatpush1.msra.mxu0 %v499
    %547 = vmatprep.subr.mxu0 0.0
    %548 = vmatpush2.msra.mxu0 0.0
    %549 = vmatprep.subr.mxu0 0.0
    %550 = vmatpush2.msra.mxu0 0.0
    %551 = vmatprep.subr.mxu0 0.0
    %552 = vmatpush2.msra.mxu0 0.0
    %553 = vmatprep.subr.mxu0 0.0
    %554 = vmatpush2.msra.mxu0 0.0
    %555 = vmatprep.subr.mxu0 0.0
    %556 = vmatpush2.msra.mxu0 0.0
    %557 = vmatprep.subr.mxu0 0.0
    %558 = vmatpush2.msra.mxu0 0.0
    %559 = vmatprep.subr.mxu0 0.0
    %560 = vmatpush2.msra.mxu0 0.0
    %561 = vmatprep.subr.mxu0 0.0
    %562 = vmatpush2.msra.mxu0 0.0
    %563 = vmatprep.subr.mxu0 0.0
    %564 = vmatpush2.msra.mxu0 0.0
    %565 = vmatprep.subr.mxu0 0.0
    %566 = vmatpush2.msra.mxu0 0.0
    %567 = vmatprep.subr.mxu0 0.0
    %568 = vmatpush2.msra.mxu0 0.0
    %569 = vmatprep.subr.mxu0 0.0
    %570 = vmatpush2.msra.mxu0 0.0
    %571 = vmatprep.subr.mxu0 0.0
    %572 = vmatpush2.msra.mxu0 0.0
    %573 = vmatprep.subr.mxu0 0.0
    %574 = vmatpush2.msra.mxu0 0.0
    %575 = vmatprep.subr.mxu0 0.0
    %576 = vmatpush2.msra.mxu0 0.0
    %577 = vmatprep.subr.mxu0 0.0
    %578 = vmatpush2.msra.mxu0 0.0
    %579 = vmatprep.mubr.f32.mxu0 0.0
    %580 = vmatmul.mubr.f32.gmra.mxu0 %v513
    %v581 = vpop.f32.mrf.mxu0
    %v582 = vadd.f32 %v511, %v581
    %v583 = vpop.f32.mrf.mxu0
    %584 = vdwg.mxu0
    %v585 = vmax.f32 %v582, 0.0
    %v586 = vand.u32 2147483647, %v582
    %v587 = vsub.f32 0.0, %v586
    %v588 = vmul.f32 %v587, 1.442695
    %v589 = vpow.pop %v588
    %v590 = vadd.f32 %v589, 1.0
    %v591 = vlog2.pop %v590
    %v592 = vmul.f32 %v591, 0.6931472
    %v593 = vadd.f32 %v585, %v592
    %595 = vrot.lane.b32.xlu0 %v593, 32
    %v596 = vpop.permute.xlu0 %595
    %v598 = vsel %vm25, %v203, %v596
    %v599 = vld [vmem:[%s2 + $0xd0] sm:$0xff]
    %v600 = vld [vmem:[%s2 + $0xd8] sm:$0xff]
    %v601 = vld [vmem:[%s2 + $0xe0] sm:$0xff]
    %v602 = vld [vmem:[%s2 + $0xe8] sm:$0xff]
    %v603 = vld [vmem:[%s2 + $0xf0] sm:$0xff]
    %v604 = vld [vmem:[%s2 + $0xf8] sm:$0xff]
    %v605 = vld [vmem:[%s2 + $0x100] sm:$0xff]
    %v606 = vld [vmem:[%s2 + $0x108] sm:$0xff]
    %v607 = vld [vmem:[%s2 + $0x110] sm:$0x1]
    %v608 = vlaneseq
    %v609 = vshrl.u32 %v608, 7
    %v610 = vsub.s32 0, %v609
    %v611 = vrot.slane %v607, %v610
    %v613 = vsel %vm121, %v598, 0
    %615 = vmatprep.subr.mxu0 0.0
    %616 = vmatpush1.msra.mxu0 0.0
    %617 = vmatprep.subr.mxu0 0.0
    %618 = vmatpush1.msra.mxu0 0.0
    %619 = vmatprep.subr.mxu0 0.0
    %620 = vmatpush1.msra.mxu0 0.0
    %621 = vmatprep.subr.mxu0 0.0
    %622 = vmatpush1.msra.mxu0 0.0
    %623 = vmatprep.subr.mxu0 0.0
    %624 = vmatpush1.msra.mxu0 0.0
    %625 = vmatprep.subr.mxu0 0.0
    %626 = vmatpush1.msra.mxu0 0.0
    %627 = vmatprep.subr.mxu0 0.0
    %628 = vmatpush1.msra.mxu0 0.0
    %629 = vmatprep.subr.mxu0 0.0
    %630 = vmatpush1.msra.mxu0 0.0
    %631 = vmatprep.subr.mxu0 0.0
    %632 = vmatpush1.msra.mxu0 %v606
    %633 = vmatprep.subr.mxu0 0.0
    %634 = vmatpush1.msra.mxu0 %v605
    %635 = vmatprep.subr.mxu0 0.0
    %636 = vmatpush1.msra.mxu0 %v604
    %637 = vmatprep.subr.mxu0 0.0
    %638 = vmatpush1.msra.mxu0 %v603
    %639 = vmatprep.subr.mxu0 0.0
    %640 = vmatpush1.msra.mxu0 %v602
    %641 = vmatprep.subr.mxu0 0.0
    %642 = vmatpush1.msra.mxu0 %v601
    %643 = vmatprep.subr.mxu0 0.0
    %644 = vmatpush1.msra.mxu0 %v600
    %645 = vmatprep.subr.mxu0 0.0
    %646 = vmatpush1.msra.mxu0 %v599
    %647 = vmatprep.subr.mxu0 0.0
    %648 = vmatpush2.msra.mxu0 0.0
    %649 = vmatprep.subr.mxu0 0.0
    %650 = vmatpush2.msra.mxu0 0.0
    %651 = vmatprep.subr.mxu0 0.0
    %652 = vmatpush2.msra.mxu0 0.0
    %653 = vmatprep.subr.mxu0 0.0
    %654 = vmatpush2.msra.mxu0 0.0
    %655 = vmatprep.subr.mxu0 0.0
    %656 = vmatpush2.msra.mxu0 0.0
    %657 = vmatprep.subr.mxu0 0.0
    %658 = vmatpush2.msra.mxu0 0.0
    %659 = vmatprep.subr.mxu0 0.0
    %660 = vmatpush2.msra.mxu0 0.0
    %661 = vmatprep.subr.mxu0 0.0
    %662 = vmatpush2.msra.mxu0 0.0
    %663 = vmatprep.subr.mxu0 0.0
    %664 = vmatpush2.msra.mxu0 0.0
    %665 = vmatprep.subr.mxu0 0.0
    %666 = vmatpush2.msra.mxu0 0.0
    %667 = vmatprep.subr.mxu0 0.0
    %668 = vmatpush2.msra.mxu0 0.0
    %669 = vmatprep.subr.mxu0 0.0
    %670 = vmatpush2.msra.mxu0 0.0
    %671 = vmatprep.subr.mxu0 0.0
    %672 = vmatpush2.msra.mxu0 0.0
    %673 = vmatprep.subr.mxu0 0.0
    %674 = vmatpush2.msra.mxu0 0.0
    %675 = vmatprep.subr.mxu0 0.0
    %676 = vmatpush2.msra.mxu0 0.0
    %677 = vmatprep.subr.mxu0 0.0
    %678 = vmatpush2.msra.mxu0 0.0
    %679 = vmatprep.mubr.f32.mxu0 0.0
    %680 = vmatmul.mubr.f32.gmra.mxu0 %v613
    %v681 = vpop.f32.mrf.mxu0
    %v682 = vadd.f32 %v611, %v681
    %v683 = vpop.f32.mrf.mxu0
    %684 = vdwg.mxu0
    %v685 = vmul.f32 %v682, 0.5
    %v686 = vmul.f32 %v685, 1.442695
    %v687 = vpow.pop %v686
    %v688 = vmul.f32 %v687, %v15
    %690 = vrot.lane.b32.xlu0 %v688, 96
    %v691 = vpop.permute.xlu0 %690
    %v693 = vadd.f32 %v682, %v691
    %v694 = vld [vmem:[%s2 + $0x118] sm:$0xff]
    %v695 = vld [vmem:[%s2 + $0x120] sm:$0xff]
    %v696 = vld [vmem:[%s2 + $0x128] sm:$0xff]
    %v697 = vld [vmem:[%s2 + $0x130] sm:$0xff]
    %v698 = vld [vmem:[%s2 + $0x138] sm:$0x1]
    %v699 = vlaneseq
    %v700 = vshrl.u32 %v699, 7
    %v701 = vsub.s32 0, %v700
    %v702 = vrot.slane %v698, %v701
    %v704 = vsel %vm25, %v693, 0
    %706 = vmatprep.subr.mxu0 0.0
    %707 = vmatpush1.msra.mxu0 0.0
    %708 = vmatprep.subr.mxu0 0.0
    %709 = vmatpush1.msra.mxu0 0.0
    %710 = vmatprep.subr.mxu0 0.0
    %711 = vmatpush1.msra.mxu0 0.0
    %712 = vmatprep.subr.mxu0 0.0
    %713 = vmatpush1.msra.mxu0 0.0
    %714 = vmatprep.subr.mxu0 0.0
    %715 = vmatpush1.msra.mxu0 0.0
    %716 = vmatprep.subr.mxu0 0.0
    %717 = vmatpush1.msra.mxu0 0.0
    %718 = vmatprep.subr.mxu0 0.0
    %719 = vmatpush1.msra.mxu0 0.0
    %720 = vmatprep.subr.mxu0 0.0
    %721 = vmatpush1.msra.mxu0 0.0
    %722 = vmatprep.subr.mxu0 0.0
    %723 = vmatpush1.msra.mxu0 0.0
    %724 = vmatprep.subr.mxu0 0.0
    %725 = vmatpush1.msra.mxu0 0.0
    %726 = vmatprep.subr.mxu0 0.0
    %727 = vmatpush1.msra.mxu0 0.0
    %728 = vmatprep.subr.mxu0 0.0
    %729 = vmatpush1.msra.mxu0 0.0
    %730 = vmatprep.subr.mxu0 0.0
    %731 = vmatpush1.msra.mxu0 %v697
    %732 = vmatprep.subr.mxu0 0.0
    %733 = vmatpush1.msra.mxu0 %v696
    %734 = vmatprep.subr.mxu0 0.0
    %735 = vmatpush1.msra.mxu0 %v695
    %736 = vmatprep.subr.mxu0 0.0
    %737 = vmatpush1.msra.mxu0 %v694
    %738 = vmatprep.subr.mxu0 0.0
    %739 = vmatpush2.msra.mxu0 0.0
    %740 = vmatprep.subr.mxu0 0.0
    %741 = vmatpush2.msra.mxu0 0.0
    %742 = vmatprep.subr.mxu0 0.0
    %743 = vmatpush2.msra.mxu0 0.0
    %744 = vmatprep.subr.mxu0 0.0
    %745 = vmatpush2.msra.mxu0 0.0
    %746 = vmatprep.subr.mxu0 0.0
    %747 = vmatpush2.msra.mxu0 0.0
    %748 = vmatprep.subr.mxu0 0.0
    %749 = vmatpush2.msra.mxu0 0.0
    %750 = vmatprep.subr.mxu0 0.0
    %751 = vmatpush2.msra.mxu0 0.0
    %752 = vmatprep.subr.mxu0 0.0
    %753 = vmatpush2.msra.mxu0 0.0
    %754 = vmatprep.subr.mxu0 0.0
    %755 = vmatpush2.msra.mxu0 0.0
    %756 = vmatprep.subr.mxu0 0.0
    %757 = vmatpush2.msra.mxu0 0.0
    %758 = vmatprep.subr.mxu0 0.0
    %759 = vmatpush2.msra.mxu0 0.0
    %760 = vmatprep.subr.mxu0 0.0
    %761 = vmatpush2.msra.mxu0 0.0
    %762 = vmatprep.subr.mxu0 0.0
    %763 = vmatpush2.msra.mxu0 0.0
    %764 = vmatprep.subr.mxu0 0.0
    %765 = vmatpush2.msra.mxu0 0.0
    %766 = vmatprep.subr.mxu0 0.0
    %767 = vmatpush2.msra.mxu0 0.0
    %768 = vmatprep.subr.mxu0 0.0
    %769 = vmatpush2.msra.mxu0 0.0
    %770 = vmatprep.mubr.f32.mxu0 0.0
    %771 = vmatmul.mubr.f32.gmra.mxu0 %v704
    %v772 = vpop.f32.mrf.mxu0
    %v773 = vadd.f32 %v702, %v772
    %v774 = vpop.f32.mrf.mxu0
    %775 = vdwg.mxu0
    %v776 = vsel %vm293, %v773, -inf
    %777 = vmax.xlane.f32.xlu0 %v776
    %v778 = vpop.xlane.xlu0 %777
    %v779 = vsub.f32 %v773, %v778
    %v780 = vmul.f32 %v779, 1.442695
    %v781 = vpow.pop %v780
    %v782 = vsel %vm293, %v781, 0.0
    %783 = vadd.xlane.f32.xlu0 %v782
    %v784 = vpop.xlane.xlu0 %783
    %v785 = vrcp.pop %v784
    %v786 = vmul.f32 %v781, %v785
    %v787 = vld [vmem:[%s2 + $0x140] sm:$0xff]
    %v788 = vld [vmem:[%s2 + $0x148] sm:$0xff]
    %v789 = vld [vmem:[%s2 + $0x150] sm:$0x1]
    %v790 = vlaneseq
    %v791 = vshrl.u32 %v790, 7
    %v792 = vsub.s32 0, %v791
    %v793 = vrot.slane %v789, %v792
    %v795 = vsel %vm293, %v786, 0
    %797 = vmatprep.subr.mxu0 0.0
    %798 = vmatpush1.msra.mxu0 0.0
    %799 = vmatprep.subr.mxu0 0.0
    %800 = vmatpush1.msra.mxu0 0.0
    %801 = vmatprep.subr.mxu0 0.0
    %802 = vmatpush1.msra.mxu0 0.0
    %803 = vmatprep.subr.mxu0 0.0
    %804 = vmatpush1.msra.mxu0 0.0
    %805 = vmatprep.subr.mxu0 0.0
    %806 = vmatpush1.msra.mxu0 0.0
    %807 = vmatprep.subr.mxu0 0.0
    %808 = vmatpush1.msra.mxu0 0.0
    %809 = vmatprep.subr.mxu0 0.0
    %810 = vmatpush1.msra.mxu0 0.0
    %811 = vmatprep.subr.mxu0 0.0
    %812 = vmatpush1.msra.mxu0 0.0
    %813 = vmatprep.subr.mxu0 0.0
    %814 = vmatpush1.msra.mxu0 0.0
    %815 = vmatprep.subr.mxu0 0.0
    %816 = vmatpush1.msra.mxu0 0.0
    %817 = vmatprep.subr.mxu0 0.0
    %818 = vmatpush1.msra.mxu0 0.0
    %819 = vmatprep.subr.mxu0 0.0
    %820 = vmatpush1.msra.mxu0 0.0
    %821 = vmatprep.subr.mxu0 0.0
    %822 = vmatpush1.msra.mxu0 0.0
    %823 = vmatprep.subr.mxu0 0.0
    %824 = vmatpush1.msra.mxu0 0.0
    %825 = vmatprep.subr.mxu0 0.0
    %826 = vmatpush1.msra.mxu0 %v788
    %827 = vmatprep.subr.mxu0 0.0
    %828 = vmatpush1.msra.mxu0 %v787
    %829 = vmatprep.subr.mxu0 0.0
    %830 = vmatpush2.msra.mxu0 0.0
    %831 = vmatprep.subr.mxu0 0.0
    %832 = vmatpush2.msra.mxu0 0.0
    %833 = vmatprep.subr.mxu0 0.0
    %834 = vmatpush2.msra.mxu0 0.0
    %835 = vmatprep.subr.mxu0 0.0
    %836 = vmatpush2.msra.mxu0 0.0
    %837 = vmatprep.subr.mxu0 0.0
    %838 = vmatpush2.msra.mxu0 0.0
    %839 = vmatprep.subr.mxu0 0.0
    %840 = vmatpush2.msra.mxu0 0.0
    %841 = vmatprep.subr.mxu0 0.0
    %842 = vmatpush2.msra.mxu0 0.0
    %843 = vmatprep.subr.mxu0 0.0
    %844 = vmatpush2.msra.mxu0 0.0
    %845 = vmatprep.subr.mxu0 0.0
    %846 = vmatpush2.msra.mxu0 0.0
    %847 = vmatprep.subr.mxu0 0.0
    %848 = vmatpush2.msra.mxu0 0.0
    %849 = vmatprep.subr.mxu0 0.0
    %850 = vmatpush2.msra.mxu0 0.0
    %851 = vmatprep.subr.mxu0 0.0
    %852 = vmatpush2.msra.mxu0 0.0
    %853 = vmatprep.subr.mxu0 0.0
    %854 = vmatpush2.msra.mxu0 0.0
    %855 = vmatprep.subr.mxu0 0.0
    %856 = vmatpush2.msra.mxu0 0.0
    %857 = vmatprep.subr.mxu0 0.0
    %858 = vmatpush2.msra.mxu0 0.0
    %859 = vmatprep.subr.mxu0 0.0
    %860 = vmatpush2.msra.mxu0 0.0
    %861 = vmatprep.mubr.f32.mxu0 0.0
    %862 = vmatmul.mubr.f32.gmra.mxu0 %v795
    %v863 = vpop.f32.mrf.mxu0
    %v864 = vadd.f32 %v793, %v863
    %v865 = vpop.f32.mrf.mxu0
    %866 = vdwg.mxu0
    %v867 = vsel %vm25, %v864, -inf
    %868 = vmax.xlane.f32.xlu0 %v867
    %v869 = vpop.xlane.xlu0 %868
    %v870 = vsub.f32 %v864, %v869
    %v871 = vmul.f32 %v870, 1.442695
    %v872 = vpow.pop %v871
    %v873 = vsel %vm25, %v872, 0.0
    %874 = vadd.xlane.f32.xlu0 %v873
    %v875 = vpop.xlane.xlu0 %874
    %v876 = vrcp.pop %v875
    %v877 = vmul.f32 %v872, %v876
    %v878 = vadd.f32 %v786, 1e-10
    %v879 = vlog2.pop %v878
    %v880 = vmul.f32 %v879, 0.6931472
    %882 = vrot.lane.b32.xlu0 %v877, 16
    %v883 = vpop.permute.xlu0 %882
    %886 = vrot.lane.b32.xlu0 %v864, 16
    %v887 = vpop.permute.xlu0 %886
    %v889 = vsel %vm293, %v880, %v883
    %vm890 = vcmask 392192
    %v891 = vsel %vm890, %v889, %v887
    %v892 = vsel %vm121, %v891, %v887
    %vm893 = vcmask 654336
    %v894 = vsel %vm893, %v892, 0.0
    %895 = vst [vmem:[#allocation2] sm:$0xff] %v894
    // Predicated region
    $region14: #{tpu_custom_call.1} parent=1 // pred_check
      _
    $region15: #{tpu_custom_call.1} parent=1 // pred_check_branch
      %897 = sbr.rel (0) target = $region17
    $region16: #{tpu_custom_call.1} parent=1 // pred_region
      %s899 = ssub.s32 128, 128
      %900 = vsyncadd [#allocation3], %s899
      %s902 = sshll.u32 [#allocation2], 4
      %s903 = int_to_ptr.vmem [resolvable:$true] %s902
      %905 = dma.vmem_to_hbm [thread:$0]  %s903, 128, %s3, [#allocation3]
    $region17: #{tpu_custom_call.1} parent=1 // pred_fallthru
      _
    // Predicated region
    $region18: #{tpu_custom_call.1} parent=1 // pred_check
      _
    $region19: #{tpu_custom_call.1} parent=1 // pred_check_branch
      %907 = sbr.rel (0) target = $region21
    $region20: #{tpu_custom_call.1} parent=1 // pred_region
      %908 = dma.done [#allocation3], 128
    $region21: #{tpu_custom_call.1} parent=1 // pred_fallthru
      _
    %909 = vsyncpa [#allocation3], 1

</llo_original>
